<compile_context>
chip_gen: v6e
topology: v6e:2x2x1
jax: 0.10.0
libtpu: 0.0.40
codegen_flags: <defaults>
</compile_context>

<pallas_src>
import functools

import jax
import jax.numpy as jnp
from jax.experimental import pallas as pl
from jax.experimental.pallas import tpu as pltpu

_VMEM_SLAB_BUDGET = 24 << 20     # per-step double-buffered slab budget (safe on v7x)
_VMEM_LIMIT_BYTES = 32 << 20     # explicit scoped-VMEM limit (v5e default is only 16 MiB)


def _complex_1x1_conv_kernel(xr_ref, xi_ref, wa_ref, wb_ref, yr_ref, yi_ref):
    """One (batch, HW-tile) block of the complex channel matmul.

    xr/xi : (C, THW)    real / imag input channels (bf16)
    wa/wb : (2K, C)     K-stacked weights [wr; wi] and [-wi; wr] (bf16, resident)
    yr/yi : (K, THW)    real / imag output channels (f32, lane-dense stores)

    (a + ib)(c + id) = (ac - bd) + i(ad + bc):
      Y2 = Wa @ xr + Wb @ xi,  Y2[:K] = yr,  Y2[K:] = yi
    """
    y2 = jnp.dot(wa_ref[...], xr_ref[...], preferred_element_type=jnp.float32)
    y2 = y2 + jnp.dot(wb_ref[...], xi_ref[...], preferred_element_type=jnp.float32)
    k = yr_ref.shape[0]
    yr_ref[...] = y2[:k].astype(yr_ref.dtype)   # sublane-aligned slice (K mult of 8)
    yi_ref[...] = y2[k:].astype(yi_ref.dtype)


def _choose_thw(hw, c, k, b, in_bytes, out_bytes, budget_bytes=_VMEM_SLAB_BUDGET):
    """Largest multiple-of-128 lane tile that divides H*W and fits the VMEM budget."""
    if hw % 128 != 0:
        # Full-extent lane block == full dim: still unmasked stores, single DMA/step.
        return hw
    # double-buffer(2) * [re+im inputs + re+im outputs] bytes per lane
    per_lane = 2 * (2 * c * in_bytes + 2 * k * out_bytes)
    t = min(hw, max(128, (budget_bytes // per_lane) // 128 * 128))
    while hw % t != 0:          # keep every block (incl. the last one) unmasked
        t -= 128
    if b == 1 and t == hw and hw > 128:
        # v7x megacore: make sure at least one parallel axis has >= 2 blocks.
        t = max(128, (hw // 2) // 128 * 128)
        while hw % t != 0:
            t -= 128
    return t


@functools.partial(jax.jit, static_argnames=("thw",))
def complex_conv2d_1x1(xr, xi, wr, wi, *, thw=None):
    """Complex 1x1 conv: xr/xi (B,C,H,W), wr/wi (K,C) -> yr/yi (B,K,H,W) float32."""
    B, C, H, W = xr.shape
    K = wr.shape[0]
    HW = H * W

    in_dtype = jnp.bfloat16            # activation/weight carry (MXU accumulates f32)
    out_dtype = jnp.float32
    in_bytes = jnp.dtype(in_dtype).itemsize
    out_bytes = jnp.dtype(out_dtype).itemsize

    # Free, contiguous reshapes only. In production the producer should emit the
    # bf16 planes directly; the casts here just demonstrate the bf16 carry.
    xr2 = xr.astype(in_dtype).reshape(B, C, HW)
    xi2 = xi.astype(in_dtype).reshape(B, C, HW)

    # K-stacked weights: 2 matmuls per block instead of 4. Tiny, resident in VMEM.
    wa = jnp.concatenate([wr, wi], axis=0).astype(in_dtype)    # (2K, C)
    wb = jnp.concatenate([-wi, wr], axis=0).astype(in_dtype)   # (2K, C)

    if thw is None:
        thw = _choose_thw(HW, C, K, B, in_bytes, out_bytes)
    # TODO(synk): if production C+K grows so large that even thw=128 blows the VMEM
    # budget, add a third 'arbitrary' grid axis over C with a VMEM accumulator
    # (pattern P3) instead of shrinking the lane tile further.

    grid = (B, pl.cdiv(HW, thw))

    out_shape = (
        jax.ShapeDtypeStruct((B, K, HW), out_dtype),
        jax.ShapeDtypeStruct((B, K, HW), out_dtype),
    )

    cost = pl.CostEstimate(
        flops=8 * B * K * C * HW,
        transcendentals=0,
        bytes_accessed=B * HW * (2 * C * in_bytes + 2 * K * out_bytes)
        + 2 * (2 * K) * C * in_bytes,
    )

    yr, yi = pl.pallas_call(
        _complex_1x1_conv_kernel,
        out_shape=out_shape,
        grid_spec=pltpu.PrefetchScalarGridSpec(
            num_scalar_prefetch=0,
            grid=grid,
            in_specs=[
                pl.BlockSpec((None, C, thw), lambda b, j: (b, 0, j)),   # xr tile
                pl.BlockSpec((None, C, thw), lambda b, j: (b, 0, j)),   # xi tile
                pl.BlockSpec((2 * K, C), lambda b, j: (0, 0)),          # Wa (resident)
                pl.BlockSpec((2 * K, C), lambda b, j: (0, 0)),          # Wb (resident)
            ],
            out_specs=[
                pl.BlockSpec((None, K, thw), lambda b, j: (b, 0, j)),   # yr tile
                pl.BlockSpec((None, K, thw), lambda b, j: (b, 0, j)),   # yi tile
            ],
        ),
        compiler_params=pltpu.CompilerParams(
            dimension_semantics=("parallel", "parallel"),
            vmem_limit_bytes=_VMEM_LIMIT_BYTES,
        ),
        cost_estimate=cost,
    )(xr2, xi2, wa, wb)

    return yr.reshape(B, K, H, W), yi.reshape(B, K, H, W)


def make_unitary_like_weight(key, out_channels, in_channels):
    """Deterministic stand-in for unitary_init: complex matrix with orthonormal
    rows, returned as separate real/imag (K, C) float32 arrays."""
    kr, ki = jax.random.split(key)
    a = jax.random.normal(kr, (out_channels, in_channels)) + 1j * jax.random.normal(
        ki, (out_channels, in_channels)
    )
    q, _ = jnp.linalg.qr(a.conj().T, mode="reduced")  # (C, min(C, K))
    w_c = q.conj().T                                  # rows orthonormal
    if w_c.shape[0] < out_channels:
        reps = -(-out_channels // w_c.shape[0])
        w_c = jnp.tile(w_c, (reps, 1))[:out_channels]
    return (
        jnp.asarray(w_c.real, dtype=jnp.float32),
        jnp.asarray(w_c.imag, dtype=jnp.float32),
    )


if __name__ == "__main__":
    # Small shapes consistent with the module (kernel_size == 1 is asserted there).
    B, C, H, W = 2, 4, 16, 16
    K = 8  # out_channels

    key = jax.random.PRNGKey(0)
    kxr, kxi, kw = jax.random.split(key, 3)

    # Complex input carried as real/imag planes (equivalent to x.real / x.imag).
    xr = jax.random.normal(kxr, (B, C, H, W), dtype=jnp.float32)
    xi = jax.random.normal(kxi, (B, C, H, W), dtype=jnp.float32)
    # Weight: "unitary_init" for a 1x1 complex conv, squeezed to (K, C).
    wr, wi = make_unitary_like_weight(kw, K, C)

    # TODO(synk): is_identity / out_channels==0 / eigenvector pre_proj branches are
    # shape bookkeeping (identity buffer / empty output / torch.load) and are not
    # run through the kernel.

    yr, yi = complex_conv2d_1x1(xr, xi, wr, wi)
    yr, yi = jax.block_until_ready((yr, yi))

    # Reference 1: full-precision complex arithmetic (loose tolerance: bf16 carry).
    xc = xr + 1j * xi                          # (B, C, H, W)
    wc = wr + 1j * wi                          # (K, C)
    yc_ref = jnp.einsum("bchw,kc->bkhw", xc, wc)
    yc = yr + 1j * yi
    assert yr.shape == (B, K, H, W), yr.shape
    assert jnp.allclose(yc, yc_ref, atol=3e-2, rtol=3e-2)

    # Reference 2: same bf16-rounded operands in f32 math (tight tolerance),
    # verifies the MXU f32 accumulation / K-stacked weight trick exactly.
    xrb = xr.astype(jnp.bfloat16).astype(jnp.float32)
    xib = xi.astype(jnp.bfloat16).astype(jnp.float32)
    wrb = wr.astype(jnp.bfloat16).astype(jnp.float32)
    wib = wi.astype(jnp.bfloat16).astype(jnp.float32)
    yr_ref2 = jnp.einsum("bchw,kc->bkhw", xrb, wrb) - jnp.einsum("bchw,kc->bkhw", xib, wib)
    yi_ref2 = jnp.einsum("bchw,kc->bkhw", xib, wrb) + jnp.einsum("bchw,kc->bkhw", xrb, wib)
    assert jnp.allclose(yr, yr_ref2, atol=1e-4, rtol=1e-4)
    assert jnp.allclose(yi, yi_ref2, atol=1e-4, rtol=1e-4)

    print("KERNEL_OK")
</pallas_src>

<mosaic_0001>
module attributes {stable_mosaic.version = 11 : i64} {
  func.func @_complex_1x1_conv_kernel(%arg0: i32, %arg1: i32, %arg2: memref<1x4x256xbf16, #tpu.memory_space<vmem>>, %arg3: memref<1x4x256xbf16, #tpu.memory_space<vmem>>, %arg4: memref<16x4xbf16, #tpu.memory_space<vmem>>, %arg5: memref<16x4xbf16, #tpu.memory_space<vmem>>, %arg6: memref<1x8x256xf32, #tpu.memory_space<vmem>>, %arg7: memref<1x8x256xf32, #tpu.memory_space<vmem>>) attributes {dimension_semantics = [#tpu.dimension_semantics<parallel>, #tpu.dimension_semantics<parallel>], iteration_bounds = array<i64: 2, 1>, scalar_prefetch = 0 : i64, scratch_operands = 0 : i64, tpu.core_type = #tpu.core_type<tc>, window_params = [{transform_indices = @transform_0, window_bounds = array<i64: 1, 4, 256>}, {transform_indices = @transform_1, window_bounds = array<i64: 1, 4, 256>}, {pipeline_mode = #tpu.pipeline_mode<synchronous>, transform_indices = @transform_2, window_bounds = array<i64: 16, 4>}, {pipeline_mode = #tpu.pipeline_mode<synchronous>, transform_indices = @transform_3, window_bounds = array<i64: 16, 4>}, {transform_indices = @transform_4, window_bounds = array<i64: 1, 8, 256>}, {transform_indices = @transform_5, window_bounds = array<i64: 1, 8, 256>}]} {
    %c0 = arith.constant 0 : index
    %c0_0 = arith.constant 0 : index
    %0 = vector.load %arg4[%c0, %c0_0] : memref<16x4xbf16, #tpu.memory_space<vmem>>, vector<16x4xbf16>
    %c0_1 = arith.constant 0 : index
    %c0_2 = arith.constant 0 : index
    %c0_3 = arith.constant 0 : index
    %1 = vector.load %arg2[%c0_1, %c0_2, %c0_3] : memref<1x4x256xbf16, #tpu.memory_space<vmem>>, vector<1x4x256xbf16>
    %2 = vector.shape_cast %1 : vector<1x4x256xbf16> to vector<4x256xbf16>
    %cst = arith.constant dense<0.000000e+00> : vector<16x256xf32>
    %3 = tpu.matmul %0, %2, %cst {dimension_numbers = #tpu.dot_dimension_numbers<[1], [0], [0], [1], [0, 0, 1, 1], [], []>} : vector<16x4xbf16>, vector<4x256xbf16>, vector<16x256xf32> -> vector<16x256xf32>
    %c0_4 = arith.constant 0 : index
    %c0_5 = arith.constant 0 : index
    %4 = vector.load %arg5[%c0_4, %c0_5] : memref<16x4xbf16, #tpu.memory_space<vmem>>, vector<16x4xbf16>
    %c0_6 = arith.constant 0 : index
    %c0_7 = arith.constant 0 : index
    %c0_8 = arith.constant 0 : index
    %5 = vector.load %arg3[%c0_6, %c0_7, %c0_8] : memref<1x4x256xbf16, #tpu.memory_space<vmem>>, vector<1x4x256xbf16>
    %6 = vector.shape_cast %5 : vector<1x4x256xbf16> to vector<4x256xbf16>
    %cst_9 = arith.constant dense<0.000000e+00> : vector<16x256xf32>
    %7 = tpu.matmul %4, %6, %cst_9 {dimension_numbers = #tpu.dot_dimension_numbers<[1], [0], [0], [1], [0, 0, 1, 1], [], []>} : vector<16x4xbf16>, vector<4x256xbf16>, vector<16x256xf32> -> vector<16x256xf32>
    %8 = arith.addf %3, %7 : vector<16x256xf32>
    %9 = vector.extract_strided_slice %8 {offsets = [0, 0], sizes = [8, 256], strides = [1, 1]} : vector<16x256xf32> to vector<8x256xf32>
    %c0_10 = arith.constant 0 : index
    %c0_11 = arith.constant 0 : index
    %c0_12 = arith.constant 0 : index
    %10 = vector.load %arg6[%c0_10, %c0_11, %c0_12] : memref<1x8x256xf32, #tpu.memory_space<vmem>>, vector<1x8x256xf32>
    %11 = vector.shape_cast %10 : vector<1x8x256xf32> to vector<8x256xf32>
    %12 = vector.shape_cast %9 : vector<8x256xf32> to vector<1x8x256xf32>
    tpu.vector_store %arg6[%c0_10, %c0_11, %c0_12], %12 {strides = array<i32>} : memref<1x8x256xf32, #tpu.memory_space<vmem>>, vector<1x8x256xf32>,
    %13 = vector.extract_strided_slice %8 {offsets = [8, 0], sizes = [8, 256], strides = [1, 1]} : vector<16x256xf32> to vector<8x256xf32>
    %c0_13 = arith.constant 0 : index
    %c0_14 = arith.constant 0 : index
    %c0_15 = arith.constant 0 : index
    %14 = vector.load %arg7[%c0_13, %c0_14, %c0_15] : memref<1x8x256xf32, #tpu.memory_space<vmem>>, vector<1x8x256xf32>
    %15 = vector.shape_cast %14 : vector<1x8x256xf32> to vector<8x256xf32>
    %16 = vector.shape_cast %13 : vector<8x256xf32> to vector<1x8x256xf32>
    tpu.vector_store %arg7[%c0_13, %c0_14, %c0_15], %16 {strides = array<i32>} : memref<1x8x256xf32, #tpu.memory_space<vmem>>, vector<1x8x256xf32>,
    return
  }
  func.func @transform_0(%arg0: i32, %arg1: i32) -> (i32, i32, i32) {
    %c0_i32 = arith.constant 0 : i32
    %c0_i32_0 = arith.constant 0 : i32
    return %arg0, %c0_i32, %arg1 : i32, i32, i32
  }
  func.func @transform_1(%arg0: i32, %arg1: i32) -> (i32, i32, i32) {
    %c0_i32 = arith.constant 0 : i32
    %c0_i32_0 = arith.constant 0 : i32
    return %arg0, %c0_i32, %arg1 : i32, i32, i32
  }
  func.func @transform_2(%arg0: i32, %arg1: i32) -> (i32, i32) {
    %c0_i32 = arith.constant 0 : i32
    %c0_i32_0 = arith.constant 0 : i32
    %c0_i32_1 = arith.constant 0 : i32
    return %c0_i32, %c0_i32_0 : i32, i32
  }
  func.func @transform_3(%arg0: i32, %arg1: i32) -> (i32, i32) {
    %c0_i32 = arith.constant 0 : i32
    %c0_i32_0 = arith.constant 0 : i32
    %c0_i32_1 = arith.constant 0 : i32
    return %c0_i32, %c0_i32_0 : i32, i32
  }
  func.func @transform_4(%arg0: i32, %arg1: i32) -> (i32, i32, i32) {
    %c0_i32 = arith.constant 0 : i32
    %c0_i32_0 = arith.constant 0 : i32
    return %arg0, %c0_i32, %arg1 : i32, i32, i32
  }
  func.func @transform_5(%arg0: i32, %arg1: i32) -> (i32, i32, i32) {
    %c0_i32 = arith.constant 0 : i32
    %c0_i32_0 = arith.constant 0 : i32
    return %arg0, %c0_i32, %arg1 : i32, i32, i32
  }
}

</mosaic_0001>

<llo_original>
// kernel: complex_conv2d_1x1.1
$region0: #{complex_conv2d_1x1.1}
  #allocation0 [shape = 'u32[]', space=smem, size = 0x4, offset = 0x4, fixed_abs, tag = 'smem constant byte address 0x4 - core index']
  #allocation1 [shape = 'u32[144,128]{1,0:T(1,128)}', space=vmem, size = 0x12000, scoped, tag = 'internal scratch']
  %s0 = inlined_call_operand.vmem [shape: bf16[2,4,256], index: 0, kind: input, shape index: {}]
  %s1 = inlined_call_operand.vmem [shape: bf16[2,4,256], index: 1, kind: input, shape index: {}]
  %s2 = inlined_call_operand.vmem [shape: bf16[16,4], index: 2, kind: input, shape index: {}]
  %s3 = inlined_call_operand.vmem [shape: bf16[16,4], index: 3, kind: input, shape index: {}]
  %s4 = inlined_call_operand.vmem [shape: f32[2,8,256], index: 4, kind: output, shape index: {0}]
  %s5 = inlined_call_operand.vmem [shape: f32[2,8,256], index: 5, kind: output, shape index: {1}]
  %6 = xla_tuple %s4, %s5
  %s7 = sld [smem:[#allocation0]]
  $region57: #{complex_conv2d_1x1.1} parent=0
    _
  %s9 = ssub.s32 1, %s7
  %s10 = scalar_select 0, %s9, %s7
  loop: start=0, step=1, limit=4
  $region2: #{complex_conv2d_1x1.1} parent=0 // loop_pre_header
    _
  $region3: #{complex_conv2d_1x1.1} parent=0 // loop_header
    %s12 = sphi 0, %s16
    %p13 = scmp.ge.s32.totalorder %s12, 4
    %s19 = sphi 0, %s31
    %s20 = sphi 0, %s27
    %s21 = sphi 0, %s19
    %s22 = sphi 0, %s20
    %s23 = sphi 0, %s21
    %s24 = sphi 0, %s22
    %s36 = sphi 0, %s38
    %s39 = sphi 0, %s36
    %s40 = sphi 0, %s39
    %s56 = sphi 0, %s40
    %s64 = sphi 0, %s66
    %s67 = sphi 0, %s64
    %s68 = sphi 0, %s67
    %s84 = sphi 0, %s68
    %s88 = sphi 0, %s88
    %s90 = sphi 0, %s88
    %s91 = sphi 0, %s90
    %s105 = sphi 0, %s91
    %s109 = sphi 0, %s109
    %s111 = sphi 0, %s109
    %s112 = sphi 0, %s111
    %s126 = sphi 0, %s112
    %s134 = sphi 0, %s136
    %s137 = sphi 0, %s134
    %s138 = sphi 0, %s137
    %s154 = sphi 0, %s138
    %s162 = sphi 0, %s164
    %s165 = sphi 0, %s162
    %s166 = sphi 0, %s165
    %s182 = sphi 0, %s166
  $region4: #{complex_conv2d_1x1.1} parent=0 // loop_header_branch
    %15 = sbr.rel (%p13) target = $region8
  $region5: #{complex_conv2d_1x1.1} parent=0 // loop_body
    %s17 = ssub.s32 %s12, 1
    %s18 = ssub.s32 %s12, 2
    %s25 = sadd.s32 1, %s20
    %p26 = scmp.ge.s32.totalorder %s25, 1
    %s27 = scalar_select %p26, 0, %s25
    %s28 = sadd.s32 1, %s19
    %s29 = scalar_select %p26, %s28, %s19
    %p30 = scmp.ge.s32.totalorder %s29, 2
    %s31 = scalar_select %p30, 0, %s29
    %s32 = ssub.s32 %s19, %s31
    %s33 = ssub.s32 %s20, %s27
    %s34 = sor.u32 %s32, %s33
    %p35 = scmp.eq.s32.totalorder %s34, 0
    %s37 = sadd.s32 %s36, 1
    %s38 = scalar_select %p35, %s36, %s37
    %p41 = pneg %p35
    %p42 = scmp.eq.s32.totalorder %s12, 1
    %p43 = por %p41, %p42
    %p44 = scmp.ne.s32.totalorder %s36, %s39
    %p45 = scmp.eq.s32.totalorder %s12, 0
    %p46 = por %p44, %p45
    %p47 = scmp.ne.s32.totalorder %s36, %s39
    %p48 = scmp.eq.s32.totalorder %s17, 1
    %p49 = por %p47, %p48
    %p50 = scmp.ne.s32.totalorder %s39, %s40
    %p51 = scmp.eq.s32.totalorder %s17, 0
    %p52 = por %p50, %p51
    %p53 = scmp.ne.s32.totalorder %s39, %s40
    %p54 = scmp.eq.s32.totalorder %s18, 1
    %p55 = por %p53, %p54
    %p57 = scmp.ne.s32.totalorder %s40, %s56
    %p58 = scmp.eq.s32.totalorder %s18, 0
    %p59 = por %p57, %p58
    %s60 = ssub.s32 %s19, %s31
    %s61 = ssub.s32 %s20, %s27
    %s62 = sor.u32 %s60, %s61
    %p63 = scmp.eq.s32.totalorder %s62, 0
    %s65 = sadd.s32 %s64, 1
    %s66 = scalar_select %p63, %s64, %s65
    %p69 = pneg %p63
    %p70 = scmp.eq.s32.totalorder %s12, 1
    %p71 = por %p69, %p70
    %p72 = scmp.ne.s32.totalorder %s64, %s67
    %p73 = scmp.eq.s32.totalorder %s12, 0
    %p74 = por %p72, %p73
    %p75 = scmp.ne.s32.totalorder %s64, %s67
    %p76 = scmp.eq.s32.totalorder %s17, 1
    %p77 = por %p75, %p76
    %p78 = scmp.ne.s32.totalorder %s67, %s68
    %p79 = scmp.eq.s32.totalorder %s17, 0
    %p80 = por %p78, %p79
    %p81 = scmp.ne.s32.totalorder %s67, %s68
    %p82 = scmp.eq.s32.totalorder %s18, 1
    %p83 = por %p81, %p82
    %p85 = scmp.ne.s32.totalorder %s68, %s84
    %p86 = scmp.eq.s32.totalorder %s18, 0
    %p87 = por %p85, %p86
    %s89 = sadd.s32 %s88, 1
    %p92 = scmp.eq.s32.totalorder %s12, 1
    %p93 = scmp.ne.s32.totalorder %s88, %s90
    %p94 = scmp.eq.s32.totalorder %s12, 0
    %p95 = por %p93, %p94
    %p96 = scmp.ne.s32.totalorder %s88, %s90
    %p97 = scmp.eq.s32.totalorder %s17, 1
    %p98 = por %p96, %p97
    %p99 = scmp.ne.s32.totalorder %s90, %s91
    %p100 = scmp.eq.s32.totalorder %s17, 0
    %p101 = por %p99, %p100
    %p102 = scmp.ne.s32.totalorder %s90, %s91
    %p103 = scmp.eq.s32.totalorder %s18, 1
    %p104 = por %p102, %p103
    %p106 = scmp.ne.s32.totalorder %s91, %s105
    %p107 = scmp.eq.s32.totalorder %s18, 0
    %p108 = por %p106, %p107
    %s110 = sadd.s32 %s109, 1
    %p113 = scmp.eq.s32.totalorder %s12, 1
    %p114 = scmp.ne.s32.totalorder %s109, %s111
    %p115 = scmp.eq.s32.totalorder %s12, 0
    %p116 = por %p114, %p115
    %p117 = scmp.ne.s32.totalorder %s109, %s111
    %p118 = scmp.eq.s32.totalorder %s17, 1
    %p119 = por %p117, %p118
    %p120 = scmp.ne.s32.totalorder %s111, %s112
    %p121 = scmp.eq.s32.totalorder %s17, 0
    %p122 = por %p120, %p121
    %p123 = scmp.ne.s32.totalorder %s111, %s112
    %p124 = scmp.eq.s32.totalorder %s18, 1
    %p125 = por %p123, %p124
    %p127 = scmp.ne.s32.totalorder %s112, %s126
    %p128 = scmp.eq.s32.totalorder %s18, 0
    %p129 = por %p127, %p128
    %s130 = ssub.s32 %s19, %s31
    %s131 = ssub.s32 %s20, %s27
    %s132 = sor.u32 %s130, %s131
    %p133 = scmp.eq.s32.totalorder %s132, 0
    %s135 = sadd.s32 %s134, 1
    %s136 = scalar_select %p133, %s134, %s135
    %p139 = pneg %p133
    %p140 = scmp.eq.s32.totalorder %s12, 1
    %p141 = por %p139, %p140
    %p142 = scmp.ne.s32.totalorder %s134, %s137
    %p143 = scmp.eq.s32.totalorder %s12, 0
    %p144 = por %p142, %p143
    %p145 = scmp.ne.s32.totalorder %s134, %s137
    %p146 = scmp.eq.s32.totalorder %s17, 1
    %p147 = por %p145, %p146
    %p148 = scmp.ne.s32.totalorder %s137, %s138
    %p149 = scmp.eq.s32.totalorder %s17, 0
    %p150 = por %p148, %p149
    %p151 = scmp.ne.s32.totalorder %s137, %s138
    %p152 = scmp.eq.s32.totalorder %s18, 1
    %p153 = por %p151, %p152
    %p155 = scmp.ne.s32.totalorder %s138, %s154
    %p156 = scmp.eq.s32.totalorder %s18, 0
    %p157 = por %p155, %p156
    %s158 = ssub.s32 %s19, %s31
    %s159 = ssub.s32 %s20, %s27
    %s160 = sor.u32 %s158, %s159
    %p161 = scmp.eq.s32.totalorder %s160, 0
    %s163 = sadd.s32 %s162, 1
    %s164 = scalar_select %p161, %s162, %s163
    %p167 = pneg %p161
    %p168 = scmp.eq.s32.totalorder %s12, 1
    %p169 = por %p167, %p168
    %p170 = scmp.ne.s32.totalorder %s162, %s165
    %p171 = scmp.eq.s32.totalorder %s12, 0
    %p172 = por %p170, %p171
    %p173 = scmp.ne.s32.totalorder %s162, %s165
    %p174 = scmp.eq.s32.totalorder %s17, 1
    %p175 = por %p173, %p174
    %p176 = scmp.ne.s32.totalorder %s165, %s166
    %p177 = scmp.eq.s32.totalorder %s17, 0
    %p178 = por %p176, %p177
    %p179 = scmp.ne.s32.totalorder %s165, %s166
    %p180 = scmp.eq.s32.totalorder %s18, 1
    %p181 = por %p179, %p180
    %p183 = scmp.ne.s32.totalorder %s166, %s182
    %p184 = scmp.eq.s32.totalorder %s18, 0
    %p185 = por %p183, %p184
    %p186 = scmp.le.s32.totalorder 1, %s12
    %p187 = scmp.lt.s32.totalorder %s12, 3
    %p188 = pnand %p186, %p187
    %p189 = pneg %p188
    // Predicated region
    $region9: #{complex_conv2d_1x1.1} parent=5 // pred_check
      _
    $region10: #{complex_conv2d_1x1.1} parent=5 // pred_check_branch
      %191 = sbr.rel (%p188) target = $region12
    $region11: #{complex_conv2d_1x1.1} parent=5 // pred_region
      %s192 = ssub.s32 %s12, 1
      // Predicated region
      $region13: #{complex_conv2d_1x1.1} parent=11 // pred_check
        %p193 = pneg %p101
      $region14: #{complex_conv2d_1x1.1} parent=11 // pred_check_branch
        %195 = sbr.rel (%p193) target = $region16
      $region15: #{complex_conv2d_1x1.1} parent=11 // pred_region
        _
      $region16: #{complex_conv2d_1x1.1} parent=11 // pred_fallthru
        _
      // Predicated region
      $region17: #{complex_conv2d_1x1.1} parent=11 // pred_check
        %p196 = pneg %p122
      $region18: #{complex_conv2d_1x1.1} parent=11 // pred_check_branch
        %198 = sbr.rel (%p196) target = $region20
      $region19: #{complex_conv2d_1x1.1} parent=11 // pred_region
        _
      $region20: #{complex_conv2d_1x1.1} parent=11 // pred_fallthru
        _
    $region12: #{complex_conv2d_1x1.1} parent=5 // pred_fallthru
      _
    %p199 = scmp.lt.s32.totalorder %s12, 2
    // Predicated region
    $region21: #{complex_conv2d_1x1.1} parent=5 // pred_check
      %p200 = pneg %p199
    $region22: #{complex_conv2d_1x1.1} parent=5 // pred_check_branch
      %202 = sbr.rel (%p200) target = $region24
    $region23: #{complex_conv2d_1x1.1} parent=5 // pred_region
      // Predicated region
      $region25: #{complex_conv2d_1x1.1} parent=23 // pred_check
        %p203 = pneg %p46
      $region26: #{complex_conv2d_1x1.1} parent=23 // pred_check_branch
        %205 = sbr.rel (%p203) target = $region28
      $region27: #{complex_conv2d_1x1.1} parent=23 // pred_region
        %s206 = smul.u32 2, %s20
        %p207 = scmp.lt.s32.totalorder %s19, 1
        %s208 = scalar_select %p207, %s19, 1
        %p209 = scmp.lt.s32.totalorder %s206, 1
        %s210 = scalar_select %p209, %s206, 1
        %s211 = smul.addr %s208, 2
        %s212 = sadd.s32 %s210, %s211
        %s213 = smul.addr %s212, 2
        %s214 = scalar_lea.vmem %s0, %s213
        %s215 = smul.u32 2, %s20
      $region28: #{complex_conv2d_1x1.1} parent=23 // pred_fallthru
        _
      // Predicated region
      $region29: #{complex_conv2d_1x1.1} parent=23 // pred_check
        %p216 = pneg %p74
      $region30: #{complex_conv2d_1x1.1} parent=23 // pred_check_branch
        %218 = sbr.rel (%p216) target = $region32
      $region31: #{complex_conv2d_1x1.1} parent=23 // pred_region
        %s219 = smul.u32 2, %s20
        %p220 = scmp.lt.s32.totalorder %s19, 1
        %s221 = scalar_select %p220, %s19, 1
        %p222 = scmp.lt.s32.totalorder %s219, 1
        %s223 = scalar_select %p222, %s219, 1
        %s224 = smul.addr %s221, 2
        %s225 = sadd.s32 %s223, %s224
        %s226 = smul.addr %s225, 2
        %s227 = scalar_lea.vmem %s1, %s226
        %s228 = smul.u32 2, %s20
      $region32: #{complex_conv2d_1x1.1} parent=23 // pred_fallthru
        _
    $region24: #{complex_conv2d_1x1.1} parent=5 // pred_fallthru
      _
    %p229 = scmp.le.s32.totalorder 1, %s12
    %p230 = scmp.lt.s32.totalorder %s12, 3
    %p231 = pnand %p229, %p230
    %p232 = pneg %p231
    // Predicated region
    $region33: #{complex_conv2d_1x1.1} parent=5 // pred_check
      _
    $region34: #{complex_conv2d_1x1.1} parent=5 // pred_check_branch
      %234 = sbr.rel (%p231) target = $region36
    $region35: #{complex_conv2d_1x1.1} parent=5 // pred_region
      %s235 = ssub.s32 %s12, 1
      %s236 = smul.u32 2, %s22
      %p237 = scmp.lt.s32.totalorder %s21, 1
      %s238 = scalar_select %p237, %s21, 1
      %p239 = scmp.lt.s32.totalorder %s236, 1
      %s240 = scalar_select %p239, %s236, 1
      %s241 = smul.addr %s238, 2
      %s242 = sadd.s32 %s240, %s241
      %s243 = smul.addr %s242, 2
      %s244 = scalar_lea.vmem %s0, %s243
      %p245 = pneg %p52
      %p246 = pneg %p49
      %s247 = smul.u32 2, %s22
      %p248 = scmp.lt.s32.totalorder %s21, 1
      %s249 = scalar_select %p248, %s21, 1
      %p250 = scmp.lt.s32.totalorder %s247, 1
      %s251 = scalar_select %p250, %s247, 1
      %s252 = smul.addr %s249, 2
      %s253 = sadd.s32 %s251, %s252
      %s254 = smul.addr %s253, 2
      %s255 = scalar_lea.vmem %s1, %s254
      %p256 = pneg %p80
      %p257 = pneg %p77
      %p258 = pneg %p101
      %p259 = pneg %p98
      %p260 = pneg %p122
      %p261 = pneg %p119
      %p262 = pneg %p150
      %p263 = pneg %p147
      %s264 = smul.u32 2, %s22
      %p265 = scmp.lt.s32.totalorder %s21, 1
      %s266 = scalar_select %p265, %s21, 1
      %p267 = scmp.lt.s32.totalorder %s264, 1
      %s268 = scalar_select %p267, %s264, 1
      %s269 = smul.addr %s266, 2
      %s270 = sadd.s32 %s268, %s269
      %s271 = smul.addr %s270, 8
      %s272 = scalar_lea.vmem %s4, %s271
      %p273 = pneg %p178
      %p274 = pneg %p175
      %s275 = smul.u32 2, %s22
      %p276 = scmp.lt.s32.totalorder %s21, 1
      %s277 = scalar_select %p276, %s21, 1
      %p278 = scmp.lt.s32.totalorder %s275, 1
      %s279 = scalar_select %p278, %s275, 1
      %s280 = smul.addr %s277, 2
      %s281 = sadd.s32 %s279, %s280
      %s282 = smul.addr %s281, 8
      %s283 = scalar_lea.vmem %s5, %s282
      %s284 = smul.u32 2, %s22
      %p285 = scmp.lt.s32.totalorder %s21, 1
      %s286 = scalar_select %p285, %s21, 1
      %p287 = scmp.lt.s32.totalorder %s284, 1
      %s288 = scalar_select %p287, %s284, 1
      %s289 = smul.addr %s286, 2
      %s290 = sadd.s32 %s288, %s289
      %s291 = smul.addr %s290, 2
      %s292 = scalar_lea.vmem %s0, %s291
      %s293 = smul.u32 2, %s22
      %s294 = smul.u32 2, %s22
      %p295 = scmp.lt.s32.totalorder %s21, 1
      %s296 = scalar_select %p295, %s21, 1
      %p297 = scmp.lt.s32.totalorder %s294, 1
      %s298 = scalar_select %p297, %s294, 1
      %s299 = smul.addr %s296, 2
      %s300 = sadd.s32 %s298, %s299
      %s301 = smul.addr %s300, 2
      %s302 = scalar_lea.vmem %s1, %s301
      %s303 = smul.u32 2, %s22
      %s304 = smul.u32 2, %s22
      %p305 = scmp.lt.s32.totalorder %s21, 1
      %s306 = scalar_select %p305, %s21, 1
      %p307 = scmp.lt.s32.totalorder %s304, 1
      %s308 = scalar_select %p307, %s304, 1
      %s309 = smul.addr %s306, 2
      %s310 = sadd.s32 %s308, %s309
      %s311 = smul.addr %s310, 8
      %s312 = scalar_lea.vmem %s4, %s311
      %s313 = smul.u32 2, %s22
      %s314 = smul.u32 2, %s22
      %p315 = scmp.lt.s32.totalorder %s21, 1
      %s316 = scalar_select %p315, %s21, 1
      %p317 = scmp.lt.s32.totalorder %s314, 1
      %s318 = scalar_select %p317, %s314, 1
      %s319 = smul.addr %s316, 2
      %s320 = sadd.s32 %s318, %s319
      %s321 = smul.addr %s320, 8
      %s322 = scalar_lea.vmem %s5, %s321
      %s323 = smul.u32 2, %s22
      %v325 = vld [vmem:[%s2] sm:$0xf]
      %v326 = vld [vmem:[%s2 + $0x4] sm:$0xf]
      %v327 = vld [vmem:[%s292] sm:$0xf]
      %v328 = vld [vmem:[%s3] sm:$0xf]
      %v329 = vld [vmem:[%s3 + $0x4] sm:$0xf]
      %v330 = vld [vmem:[%s302] sm:$0xf]
      %v333 = vunpack.c.l.b16 %v328
      %v334 = vunpack.c.l.b16 %v329
      %v335 = vpack.c.b16 %v334, %v333
      %v338 = vunpack.c.l.s4 1983009808
      %v339 = vunpack.c.0.s8 %v338
      %v340 = vlaneseq
      %v341 = vshrl.u32 %v340, 7
      %v342 = vsub.s32 %v339, %v341
      %v343 = vrot.slane %v330, %v342
      %v344 = vcombine.high %v343, %v343
      %vm345 = vcmask 31744
      %v347 = vsel %vm345, %v335, 0
      %vm349 = vcmask 1041408
      %v351 = vsel %vm349, %v343, 0
      %v354 = vsel %vm349, %v344, 0
      %356 = vmatprep.subr.bf16.mxu0 0
      %357 = vmatpush1.bf16.msra.mxu0 0
      %358 = vmatprep.subr.bf16.mxu0 0
      %359 = vmatpush1.bf16.msra.mxu0 0
      %360 = vmatprep.subr.bf16.mxu0 0
      %361 = vmatpush1.bf16.msra.mxu0 0
      %362 = vmatprep.subr.bf16.mxu0 0
      %363 = vmatpush1.bf16.msra.mxu0 0
      %364 = vmatprep.subr.bf16.mxu0 0
      %365 = vmatpush1.bf16.msra.mxu0 0
      %366 = vmatprep.subr.bf16.mxu0 0
      %367 = vmatpush1.bf16.msra.mxu0 0
      %368 = vmatprep.subr.bf16.mxu0 0
      %369 = vmatpush1.bf16.msra.mxu0 0
      %370 = vmatprep.subr.bf16.mxu0 %v354
      %371 = vmatpush1.bf16.msra.mxu0 %v351
      %372 = vmatprep.subr.bf16.mxu0 0
      %373 = vmatpush2.bf16.msra.mxu0 0
      %374 = vmatprep.subr.bf16.mxu0 0
      %375 = vmatpush2.bf16.msra.mxu0 0
      %376 = vmatprep.subr.bf16.mxu0 0
      %377 = vmatpush2.bf16.msra.mxu0 0
      %378 = vmatprep.subr.bf16.mxu0 0
      %379 = vmatpush2.bf16.msra.mxu0 0
      %380 = vmatprep.subr.bf16.mxu0 0
      %381 = vmatpush2.bf16.msra.mxu0 0
      %382 = vmatprep.subr.bf16.mxu0 0
      %383 = vmatpush2.bf16.msra.mxu0 0
      %384 = vmatprep.subr.bf16.mxu0 0
      %385 = vmatpush2.bf16.msra.mxu0 0
      %386 = vmatprep.subr.bf16.mxu0 0
      %387 = vmatpush2.bf16.msra.mxu0 0
      %388 = vmatprep.mubr.bf16.mxu0 0
      %389 = vmatmul.mubr.bf16.gmra.mxu0 %v347
      %v390 = vpop.f32.mrf.mxu0
      %v391 = vadd.f32 0.0, %v390
      %v392 = vpop.f32.mrf.mxu0
      %v393 = vadd.f32 0.0, %v392
      %v394 = vpop.f32.mrf.mxu0
      %v395 = vadd.f32 0.0, %v394
      %v396 = vpop.f32.mrf.mxu0
      %v397 = vadd.f32 0.0, %v396
      %398 = vdwg.mxu0
      %v401 = vunpack.c.l.b16 %v325
      %v402 = vunpack.c.l.b16 %v326
      %v403 = vpack.c.b16 %v402, %v401
      %v406 = vunpack.c.l.s4 1983009808
      %v407 = vunpack.c.0.s8 %v406
      %v408 = vlaneseq
      %v409 = vshrl.u32 %v408, 7
      %v410 = vsub.s32 %v407, %v409
      %v411 = vrot.slane %v327, %v410
      %v412 = vcombine.high %v411, %v411
      %v414 = vsel %vm345, %v403, 0
      %v417 = vsel %vm349, %v411, 0
      %v420 = vsel %vm349, %v412, 0
      %422 = vmatprep.subr.bf16.mxu0 0
      %423 = vmatpush1.bf16.msra.mxu0 0
      %424 = vmatprep.subr.bf16.mxu0 0
      %425 = vmatpush1.bf16.msra.mxu0 0
      %426 = vmatprep.subr.bf16.mxu0 0
      %427 = vmatpush1.bf16.msra.mxu0 0
      %428 = vmatprep.subr.bf16.mxu0 0
      %429 = vmatpush1.bf16.msra.mxu0 0
      %430 = vmatprep.subr.bf16.mxu0 0
      %431 = vmatpush1.bf16.msra.mxu0 0
      %432 = vmatprep.subr.bf16.mxu0 0
      %433 = vmatpush1.bf16.msra.mxu0 0
      %434 = vmatprep.subr.bf16.mxu0 0
      %435 = vmatpush1.bf16.msra.mxu0 0
      %436 = vmatprep.subr.bf16.mxu0 %v420
      %437 = vmatpush1.bf16.msra.mxu0 %v417
      %438 = vmatprep.subr.bf16.mxu0 0
      %439 = vmatpush2.bf16.msra.mxu0 0
      %440 = vmatprep.subr.bf16.mxu0 0
      %441 = vmatpush2.bf16.msra.mxu0 0
      %442 = vmatprep.subr.bf16.mxu0 0
      %443 = vmatpush2.bf16.msra.mxu0 0
      %444 = vmatprep.subr.bf16.mxu0 0
      %445 = vmatpush2.bf16.msra.mxu0 0
      %446 = vmatprep.subr.bf16.mxu0 0
      %447 = vmatpush2.bf16.msra.mxu0 0
      %448 = vmatprep.subr.bf16.mxu0 0
      %449 = vmatpush2.bf16.msra.mxu0 0
      %450 = vmatprep.subr.bf16.mxu0 0
      %451 = vmatpush2.bf16.msra.mxu0 0
      %452 = vmatprep.subr.bf16.mxu0 0
      %453 = vmatpush2.bf16.msra.mxu0 0
      %454 = vmatprep.mubr.bf16.mxu0 0
      %455 = vmatmul.mubr.bf16.gmra.mxu0 %v414
      %v456 = vpop.f32.mrf.mxu0
      %v457 = vadd.f32 %v391, %v456
      %v458 = vpop.f32.mrf.mxu0
      %v459 = vadd.f32 %v393, %v458
      %v460 = vpop.f32.mrf.mxu0
      %v461 = vadd.f32 %v395, %v460
      %v462 = vpop.f32.mrf.mxu0
      %v463 = vadd.f32 %v397, %v462
      %464 = vdwg.mxu0
      %465 = vst [vmem:[%s312] sm:$0xff] %v457
      %466 = vst [vmem:[%s312 + $0x8] sm:$0xff] %v459
      %467 = vst [vmem:[%s322] sm:$0xff] %v461
      %468 = vst [vmem:[%s322 + $0x8] sm:$0xff] %v463
      %s469 = smul.u32 2, %s22
      %p470 = scmp.lt.s32.totalorder %s21, 1
      %s471 = scalar_select %p470, %s21, 1
      %p472 = scmp.lt.s32.totalorder %s469, 1
      %s473 = scalar_select %p472, %s469, 1
      %s474 = smul.addr %s471, 2
      %s475 = sadd.s32 %s473, %s474
      %s476 = smul.addr %s475, 8
      %s477 = scalar_lea.vmem %s4, %s476
      %s478 = smul.u32 2, %s22
      %p479 = scmp.lt.s32.totalorder %s21, 1
      %s480 = scalar_select %p479, %s21, 1
      %p481 = scmp.lt.s32.totalorder %s478, 1
      %s482 = scalar_select %p481, %s478, 1
      %s483 = smul.addr %s480, 2
      %s484 = sadd.s32 %s482, %s483
      %s485 = smul.addr %s484, 8
      %s486 = scalar_lea.vmem %s5, %s485
      // Predicated region
      $region37: #{complex_conv2d_1x1.1} parent=35 // pred_check
        %p487 = pneg %p147
      $region38: #{complex_conv2d_1x1.1} parent=35 // pred_check_branch
        %489 = sbr.rel (%p487) target = $region40
      $region39: #{complex_conv2d_1x1.1} parent=35 // pred_region
        %s490 = smul.u32 2, %s22
      $region40: #{complex_conv2d_1x1.1} parent=35 // pred_fallthru
        _
      // Predicated region
      $region41: #{complex_conv2d_1x1.1} parent=35 // pred_check
        %p491 = pneg %p175
      $region42: #{complex_conv2d_1x1.1} parent=35 // pred_check_branch
        %493 = sbr.rel (%p491) target = $region44
      $region43: #{complex_conv2d_1x1.1} parent=35 // pred_region
        %s494 = smul.u32 2, %s22
      $region44: #{complex_conv2d_1x1.1} parent=35 // pred_fallthru
        _
    $region36: #{complex_conv2d_1x1.1} parent=5 // pred_fallthru
      _
    %p495 = scmp.le.s32.totalorder 2, %s12
    // Predicated region
    $region45: #{complex_conv2d_1x1.1} parent=5 // pred_check
      %p496 = pneg %p495
    $region46: #{complex_conv2d_1x1.1} parent=5 // pred_check_branch
      %498 = sbr.rel (%p496) target = $region48
    $region47: #{complex_conv2d_1x1.1} parent=5 // pred_region
      %s499 = ssub.s32 %s12, 2
      // Predicated region
      $region49: #{complex_conv2d_1x1.1} parent=47 // pred_check
        %p500 = pneg %p153
      $region50: #{complex_conv2d_1x1.1} parent=47 // pred_check_branch
        %502 = sbr.rel (%p500) target = $region52
      $region51: #{complex_conv2d_1x1.1} parent=47 // pred_region
        %s503 = smul.u32 2, %s24
        %p504 = scmp.lt.s32.totalorder %s23, 1
        %s505 = scalar_select %p504, %s23, 1
        %p506 = scmp.lt.s32.totalorder %s503, 1
        %s507 = scalar_select %p506, %s503, 1
        %s508 = smul.addr %s505, 2
        %s509 = sadd.s32 %s507, %s508
        %s510 = smul.addr %s509, 8
        %s511 = scalar_lea.vmem %s4, %s510
      $region52: #{complex_conv2d_1x1.1} parent=47 // pred_fallthru
        _
      // Predicated region
      $region53: #{complex_conv2d_1x1.1} parent=47 // pred_check
        %p512 = pneg %p181
      $region54: #{complex_conv2d_1x1.1} parent=47 // pred_check_branch
        %514 = sbr.rel (%p512) target = $region56
      $region55: #{complex_conv2d_1x1.1} parent=47 // pred_region
        %s515 = smul.u32 2, %s24
        %p516 = scmp.lt.s32.totalorder %s23, 1
        %s517 = scalar_select %p516, %s23, 1
        %p518 = scmp.lt.s32.totalorder %s515, 1
        %s519 = scalar_select %p518, %s515, 1
        %s520 = smul.addr %s517, 2
        %s521 = sadd.s32 %s519, %s520
        %s522 = smul.addr %s521, 8
        %s523 = scalar_lea.vmem %s5, %s522
      $region56: #{complex_conv2d_1x1.1} parent=47 // pred_fallthru
        _
    $region48: #{complex_conv2d_1x1.1} parent=5 // pred_fallthru
      _
  $region6: #{complex_conv2d_1x1.1} parent=0 // loop_footer
    %s16 = sadd.s32 1, %s12
  $region7: #{complex_conv2d_1x1.1} parent=0 // loop_footer_branch
    %11 = sbr.rel target = $region3
  $region8: #{complex_conv2d_1x1.1} parent=0 // loop_exit
    _

</llo_original>
